<compile_context>
chip_gen: v5e
topology: v5e:2x2
jax: 0.10.0
libtpu: 0.0.40
codegen_flags: <defaults>
</compile_context>

<pallas_src>
import functools
import math

import jax
import jax.numpy as jnp
from jax.experimental import pallas as pl
from jax.experimental.pallas import tpu as pltpu


def _layernorm(x, w, b, eps=1e-5):
    mu = jnp.mean(x, axis=-1, keepdims=True)
    var = jnp.mean((x - mu) ** 2, axis=-1, keepdims=True)
    return (x - mu) * jax.lax.rsqrt(var + eps) * w + b


# ---------------------------------------------------------------------------
# Kernel 1: fused Q/K/V projection (all heads at once, lane-dense outputs).
# ---------------------------------------------------------------------------
def qkv_proj_kernel(x_ref, wq_ref, wk_ref, wv_ref, q_ref, k_ref, v_ref):
    x = x_ref[...].astype(jnp.bfloat16)
    q_ref[...] = jnp.dot(x, wq_ref[...],
                         preferred_element_type=jnp.float32).astype(jnp.bfloat16)
    k_ref[...] = jnp.dot(x, wk_ref[...],
                         preferred_element_type=jnp.float32).astype(jnp.bfloat16)
    v_ref[...] = jnp.dot(x, wv_ref[...],
                         preferred_element_type=jnp.float32).astype(jnp.bfloat16)


# ---------------------------------------------------------------------------
# Kernel 2: causal flash attention + output projection + residual + LN1.
# ---------------------------------------------------------------------------
def attention_kernel(
    xq_ref,       # (tq, D)        f32  residual rows of X
    q_ref,        # (tq, H*dk)     bf16 (pre-scaled by 1/sqrt(dk))
    k_ref,        # (tk, H*dk)     bf16
    v_ref,        # (tk, H*dv)     bf16
    wproj_ref,    # (H*dv, D)      bf16
    bproj_ref,    # (1, D)         f32
    ln1w_ref,     # (1, D)         f32
    ln1b_ref,     # (1, D)         f32
    h1_ref,       # (tq, D)        f32  output (post-LN1 activations)
    m_scr,        # (H, tq, 1)     f32  running max
    l_scr,        # (H, tq, 1)     f32  running denominator
    acc_scr,      # (tq, H*dv)     f32  lane-dense running numerator
    *,
    n_heads: int,
    d_k: int,
    d_v: int,
    block_q: int,
    block_kv: int,
):
    qi = pl.program_id(0)
    ki = pl.program_id(1)
    nk = pl.num_programs(1)

    @pl.when(ki == 0)
    def _init():
        m_scr[...] = jnp.full(m_scr.shape, -1e30, jnp.float32)
        l_scr[...] = jnp.zeros(l_scr.shape, jnp.float32)
        acc_scr[...] = jnp.zeros(acc_scr.shape, jnp.float32)

    # Compute only for KV blocks that intersect the causal region of this q block.
    @pl.when(ki * block_kv < (qi + 1) * block_q)
    def _attend():
        q = q_ref[...]          # (tq, H*dk) bf16
        k = k_ref[...]          # (tk, H*dk) bf16
        v = v_ref[...]          # (tk, H*dv) bf16

        # Per-tile causal mask from block offsets (finite fill; never S x S).
        rows = qi * block_q + jax.lax.broadcasted_iota(
            jnp.int32, (block_q, block_kv), 0)
        cols = ki * block_kv + jax.lax.broadcasted_iota(
            jnp.int32, (block_q, block_kv), 1)
        causal = cols <= rows

        pv_parts = []
        alpha_parts = []
        # TODO(synk): for large n_heads use a batched dot_general / fori_loop to
        # bound vreg live ranges; with H=4 only tiny per-head carries survive
        # each unrolled iteration (pv (tq,dv) + alpha (tq,1)).
        for h in range(n_heads):
            qh = q[:, h * d_k:(h + 1) * d_k]           # (tq, dk)
            kh = k[:, h * d_k:(h + 1) * d_k]           # (tk, dk)
            vh = v[:, h * d_v:(h + 1) * d_v]           # (tk, dv)

            s = jax.lax.dot_general(                    # (tq, tk) f32
                qh, kh, (((1,), (1,)), ((), ())),
                preferred_element_type=jnp.float32)
            s = jnp.where(causal, s, -1e30)

            m_prev = m_scr[h]                           # (tq, 1)
            m_new = jnp.maximum(m_prev, jnp.max(s, axis=-1, keepdims=True))
            alpha = jnp.exp(m_prev - m_new)             # (tq, 1)
            p = jnp.exp(s - m_new)                      # (tq, tk)

            l_scr[h] = alpha * l_scr[h] + jnp.sum(p, axis=-1, keepdims=True)
            m_scr[h] = m_new

            pv_parts.append(jax.lax.dot_general(        # (tq, dv) f32
                p.astype(jnp.bfloat16), vh, (((1,), (0,)), ((), ())),
                preferred_element_type=jnp.float32))
            alpha_parts.append(jnp.broadcast_to(alpha, (block_q, d_v)))

        # Single lane-dense accumulator update per KV step.
        pv_dense = jnp.concatenate(pv_parts, axis=-1)        # (tq, H*dv)
        alpha_dense = jnp.concatenate(alpha_parts, axis=-1)  # (tq, H*dv)
        acc_scr[...] = alpha_dense * acc_scr[...] + pv_dense

    @pl.when(ki == nk - 1)
    def _finalize():
        # Exact reciprocal: runs once per query block (essentially free).
        inv_parts = [
            jnp.broadcast_to(pl.reciprocal(l_scr[h], approx=False),
                             (block_q, d_v))
            for h in range(n_heads)
        ]
        inv_dense = jnp.concatenate(inv_parts, axis=-1)       # (tq, H*dv)
        z_cat = (acc_scr[...] * inv_dense).astype(jnp.bfloat16)

        # Output projection (single lane-dense matmul) + residual + LN1.
        z = jnp.dot(z_cat, wproj_ref[...],
                    preferred_element_type=jnp.float32) + bproj_ref[...]
        h1_ref[...] = _layernorm(
            xq_ref[...] + z, ln1w_ref[...], ln1b_ref[...]).astype(h1_ref.dtype)


# ---------------------------------------------------------------------------
# Kernel 3: FFN (Linear -> ReLU -> Linear) + residual + LN2, d_ff tiled.
# ---------------------------------------------------------------------------
def ffn_kernel(h1_ref, w1_ref, b1_ref, w2_ref, b2_ref, ln2w_ref, ln2b_ref,
               out_ref, acc_scr):
    fi = pl.program_id(1)

    @pl.when(fi == 0)
    def _init():
        acc_scr[...] = jnp.zeros(acc_scr.shape, jnp.float32)

    h1 = h1_ref[...]
    f1 = jnp.maximum(
        jnp.dot(h1.astype(jnp.bfloat16), w1_ref[...],
                preferred_element_type=jnp.float32) + b1_ref[...],
        0.0)
    acc_scr[...] += jnp.dot(f1.astype(jnp.bfloat16), w2_ref[...],
                            preferred_element_type=jnp.float32)

    @pl.when(fi == pl.num_programs(1) - 1)
    def _finalize():
        f2 = acc_scr[...] + b2_ref[...]
        out_ref[...] = _layernorm(
            h1 + f2, ln2w_ref[...], ln2b_ref[...]).astype(out_ref.dtype)


# ---------------------------------------------------------------------------
# Host-side wrapper.
# ---------------------------------------------------------------------------
def _padded_bytes(shape, itemsize):
    s = list(shape)
    s[-1] = -(-s[-1] // 128) * 128
    if len(s) >= 2:
        s[-2] = -(-s[-2] // 8) * 8
    n = 1
    for d in s:
        n *= d
    return n * itemsize


def _vmem_limit(block_bytes, scratch_bytes=0):
    # Double-buffered pipeline tiles + scratch + headroom; 16 MiB floor keeps us
    # clear of under-budgeting at small shapes, 56 MiB ceiling respects v7x.
    need = 2 * sum(block_bytes) + scratch_bytes + (4 << 20)
    return int(min(56 << 20, max(16 << 20, need)))


def xformer_decoder_block(x, params, *, n_heads, d_k, d_v,
                          block_q=128, block_kv=128):
    S, D = x.shape
    d_ff = params["w1"].shape[1]
    block_q = min(block_q, S)
    block_kv = min(block_kv, S)
    assert S % block_q == 0 and S % block_kv == 0
    nq, nk = S // block_q, S // block_kv

    # Host-side weight packing: per-head (H, D, dk|dv) -> lane-dense bf16,
    # attention scale folded into the query weights.
    scale = 1.0 / math.sqrt(d_k)
    wq = (jnp.transpose(params["wq"], (1, 0, 2)).reshape(D, n_heads * d_k)
          * scale).astype(jnp.bfloat16)
    wk = jnp.transpose(params["wk"], (1, 0, 2)).reshape(D, n_heads * d_k).astype(jnp.bfloat16)
    wv = jnp.transpose(params["wv"], (1, 0, 2)).reshape(D, n_heads * d_v).astype(jnp.bfloat16)
    wproj = params["wproj"].astype(jnp.bfloat16)
    w1 = params["w1"].astype(jnp.bfloat16)
    w2 = params["w2"].astype(jnp.bfloat16)

    const2 = lambda *_: (0, 0)

    # ---------------- 1) Q/K/V projection (one pass over the sequence) -----
    block_r = min(128, S)
    assert S % block_r == 0
    nr = S // block_r

    proj_blocks = [
        _padded_bytes((block_r, D), 4),
        _padded_bytes((D, n_heads * d_k), 2) * 2,
        _padded_bytes((D, n_heads * d_v), 2),
        _padded_bytes((block_r, n_heads * d_k), 2) * 2,
        _padded_bytes((block_r, n_heads * d_v), 2),
    ]
    proj_cost = pl.CostEstimate(
        flops=int(2 * S * D * n_heads * (2 * d_k + d_v)),
        transcendentals=0,
        bytes_accessed=int(S * D * 4
                           + (wq.size + wk.size + wv.size) * 2
                           + S * n_heads * (2 * d_k + d_v) * 2))

    q_all, k_all, v_all = pl.pallas_call(
        qkv_proj_kernel,
        out_shape=(jax.ShapeDtypeStruct((S, n_heads * d_k), jnp.bfloat16),
                   jax.ShapeDtypeStruct((S, n_heads * d_k), jnp.bfloat16),
                   jax.ShapeDtypeStruct((S, n_heads * d_v), jnp.bfloat16)),
        grid_spec=pltpu.PrefetchScalarGridSpec(
            num_scalar_prefetch=0,
            grid=(nr,),
            in_specs=[
                pl.BlockSpec((block_r, D), lambda r: (r, 0)),
                pl.BlockSpec((D, n_heads * d_k), const2),
                pl.BlockSpec((D, n_heads * d_k), const2),
                pl.BlockSpec((D, n_heads * d_v), const2),
            ],
            out_specs=(
                pl.BlockSpec((block_r, n_heads * d_k), lambda r: (r, 0)),
                pl.BlockSpec((block_r, n_heads * d_k), lambda r: (r, 0)),
                pl.BlockSpec((block_r, n_heads * d_v), lambda r: (r, 0)),
            )),
        compiler_params=pltpu.CompilerParams(
            dimension_semantics=("parallel",),
            vmem_limit_bytes=_vmem_limit(proj_blocks)),
        cost_estimate=proj_cost,
    )(x, wq, wk, wv)

    # ---------------- 2) flash attention + proj + residual + LN1 -----------
    def kv_block_map(qi, ki):
        # Clamp causally-skipped KV blocks onto the last valid (already
        # resident) block so the pipeline issues no DMA for work pl.when skips.
        last_valid = ((qi + 1) * block_q - 1) // block_kv
        return (jnp.minimum(ki, last_valid), 0)

    attn_kernel = functools.partial(
        attention_kernel, n_heads=n_heads, d_k=d_k, d_v=d_v,
        block_q=block_q, block_kv=block_kv)

    valid_pairs = sum(min(nk, ((qi + 1) * block_q - 1) // block_kv + 1)
                      for qi in range(nq))
    attn_blocks = [
        _padded_bytes((block_q, D), 4),
        _padded_bytes((block_q, n_heads * d_k), 2),
        _padded_bytes((block_kv, n_heads * d_k), 2),
        _padded_bytes((block_kv, n_heads * d_v), 2),
        _padded_bytes((n_heads * d_v, D), 2),
        _padded_bytes((1, D), 4) * 3,
        _padded_bytes((block_q, D), 4),
    ]
    attn_scratch = (_padded_bytes((n_heads, block_q, 1), 4) * 2
                    + _padded_bytes((block_q, n_heads * d_v), 4))
    attn_cost = pl.CostEstimate(
        flops=int(2 * valid_pairs * block_q * block_kv * n_heads * (d_k + d_v)
                  + 2 * S * n_heads * d_v * D + 10 * S * D),
        transcendentals=int(valid_pairs * block_q * (block_kv + 1) * n_heads),
        bytes_accessed=int(
            S * D * 4                                           # residual rows
            + S * n_heads * d_k * 2                             # Q (once per q block)
            + valid_pairs * block_kv * n_heads * (d_k + d_v) * 2  # causal K/V re-stream
            + S * D * 4                                         # h1 out
            + n_heads * d_v * D * 2 + 7 * D * 4))

    h1 = pl.pallas_call(
        attn_kernel,
        out_shape=jax.ShapeDtypeStruct((S, D), jnp.float32),
        grid_spec=pltpu.PrefetchScalarGridSpec(
            num_scalar_prefetch=0,
            grid=(nq, nk),
            in_specs=[
                pl.BlockSpec((block_q, D), lambda qi, ki: (qi, 0)),            # X rows
                pl.BlockSpec((block_q, n_heads * d_k), lambda qi, ki: (qi, 0)),  # Q
                pl.BlockSpec((block_kv, n_heads * d_k), kv_block_map),         # K (clamped)
                pl.BlockSpec((block_kv, n_heads * d_v), kv_block_map),         # V (clamped)
                pl.BlockSpec((n_heads * d_v, D), const2),                      # wproj
                pl.BlockSpec((1, D), const2),                                  # bproj
                pl.BlockSpec((1, D), const2),                                  # ln1w
                pl.BlockSpec((1, D), const2),                                  # ln1b
            ],
            out_specs=pl.BlockSpec((block_q, D), lambda qi, ki: (qi, 0)),
            scratch_shapes=[
                pltpu.VMEM((n_heads, block_q, 1), jnp.float32),       # m
                pltpu.VMEM((n_heads, block_q, 1), jnp.float32),       # l
                pltpu.VMEM((block_q, n_heads * d_v), jnp.float32),    # lane-dense acc
            ]),
        compiler_params=pltpu.CompilerParams(
            dimension_semantics=("parallel", "arbitrary"),
            vmem_limit_bytes=_vmem_limit(attn_blocks, attn_scratch)),
        cost_estimate=attn_cost,
    )(x, q_all, k_all, v_all, wproj, params["bproj"],
      params["ln1w"], params["ln1b"])

    # ---------------- 3) FFN + residual + LN2 (separate call) --------------
    block_rows = min(128, S)
    assert S % block_rows == 0
    block_ff = d_ff if (d_ff <= 512 or d_ff % 512 != 0) else 512
    assert d_ff % block_ff == 0
    n_rows, n_ff = S // block_rows, d_ff // block_ff

    ffn_blocks = [
        _padded_bytes((block_rows, D), 4),
        _padded_bytes((D, block_ff), 2),
        _padded_bytes((1, block_ff), 4),
        _padded_bytes((block_ff, D), 2),
        _padded_bytes((1, D), 4) * 3,
        _padded_bytes((block_rows, D), 4),
    ]
    ffn_scratch = _padded_bytes((block_rows, D), 4)
    ffn_cost = pl.CostEstimate(
        flops=int(4 * S * D * d_ff + 10 * S * D),
        transcendentals=int(S),
        bytes_accessed=int(2 * S * D * 4
                           + n_rows * 2 * D * d_ff * 2   # w1/w2 streamed per row block
                           + (d_ff + 3 * D) * 4))

    out = pl.pallas_call(
        ffn_kernel,
        out_shape=jax.ShapeDtypeStruct((S, D), jnp.float32),
        grid_spec=pltpu.PrefetchScalarGridSpec(
            num_scalar_prefetch=0,
            grid=(n_rows, n_ff),
            in_specs=[
                pl.BlockSpec((block_rows, D), lambda r, f: (r, 0)),   # h1
                pl.BlockSpec((D, block_ff), lambda r, f: (0, f)),     # w1 tile
                pl.BlockSpec((1, block_ff), lambda r, f: (0, f)),     # b1 tile
                pl.BlockSpec((block_ff, D), lambda r, f: (f, 0)),     # w2 tile
                pl.BlockSpec((1, D), const2),                         # b2
                pl.BlockSpec((1, D), const2),                         # ln2w
                pl.BlockSpec((1, D), const2),                         # ln2b
            ],
            out_specs=pl.BlockSpec((block_rows, D), lambda r, f: (r, 0)),
            scratch_shapes=[pltpu.VMEM((block_rows, D), jnp.float32)]),
        compiler_params=pltpu.CompilerParams(
            dimension_semantics=("parallel", "arbitrary"),
            vmem_limit_bytes=_vmem_limit(ffn_blocks, ffn_scratch)),
        cost_estimate=ffn_cost,
    )(h1, w1, params["b1"], w2, params["b2"], params["ln2w"], params["ln2b"])

    return out


# ---------------------------------------------------------------------------
# Parameter init + pure-JAX reference (mirrors the PyTorch module, eval mode).
# ---------------------------------------------------------------------------
def init_params(key, n_heads, d_model, d_k, d_v, d_ff):
    keys = jax.random.split(key, 10)

    def xavier(k, shape):
        fan_in, fan_out = shape
        limit = math.sqrt(6.0 / (fan_in + fan_out))
        return jax.random.uniform(k, shape, jnp.float32, -limit, limit)

    wq = jnp.stack([xavier(k, (d_model, d_k))
                    for k in jax.random.split(keys[0], n_heads)])
    wk = jnp.stack([xavier(k, (d_model, d_k))
                    for k in jax.random.split(keys[1], n_heads)])
    wv = jnp.stack([xavier(k, (d_model, d_v))
                    for k in jax.random.split(keys[2], n_heads)])

    def linear(kw, kb, in_f, out_f):
        lim = 1.0 / math.sqrt(in_f)
        w = jax.random.uniform(kw, (in_f, out_f), jnp.float32, -lim, lim)
        b = jax.random.uniform(kb, (1, out_f), jnp.float32, -lim, lim)
        return w, b

    wproj, bproj = linear(keys[3], keys[4], n_heads * d_v, d_model)
    w1, b1 = linear(keys[5], keys[6], d_model, d_ff)
    w2, b2 = linear(keys[7], keys[8], d_ff, d_model)

    return {
        "wq": wq, "wk": wk, "wv": wv,
        "wproj": wproj, "bproj": bproj,
        "ln1w": jnp.ones((1, d_model), jnp.float32),
        "ln1b": jnp.zeros((1, d_model), jnp.float32),
        "w1": w1, "b1": b1, "w2": w2, "b2": b2,
        "ln2w": jnp.ones((1, d_model), jnp.float32),
        "ln2b": jnp.zeros((1, d_model), jnp.float32),
    }


def reference_block(x, params, *, n_heads, d_k):
    S, D = x.shape
    heads = []
    mask = jnp.tril(jnp.ones((S, S), bool))
    for h in range(n_heads):
        Q = x @ params["wq"][h]
        K = x @ params["wk"][h]
        V = x @ params["wv"][h]
        sc = (Q @ K.T) / math.sqrt(d_k)
        sc = jnp.where(mask, sc, -jnp.inf)
        heads.append(jax.nn.softmax(sc, axis=1) @ V)
    Z = jnp.concatenate(heads, axis=1) @ params["wproj"] + params["bproj"]

    def ln(v, w, b):
        mu = v.mean(-1, keepdims=True)
        var = ((v - mu) ** 2).mean(-1, keepdims=True)
        return (v - mu) / jnp.sqrt(var + 1e-5) * w + b

    H1 = ln(x + Z, params["ln1w"], params["ln1b"])
    F = jnp.maximum(H1 @ params["w1"] + params["b1"], 0.0) @ params["w2"] + params["b2"]
    return ln(H1 + F, params["ln2w"], params["ln2b"])


if __name__ == "__main__":
    # TODO(synk): dropout is train-time only; the eval-mode forward (identity) is implemented.
    n_heads, d_model, d_k, d_v, d_ff = 4, 32, 8, 8, 64
    seq_len = 256   # 2x2 attention grid: exercises causal skip + clamped KV DMA

    key = jax.random.PRNGKey(0)
    k_x, k_p = jax.random.split(key)
    x = jax.random.normal(k_x, (seq_len, d_model), jnp.float32)
    params = init_params(k_p, n_heads, d_model, d_k, d_v, d_ff)

    out = xformer_decoder_block(x, params, n_heads=n_heads, d_k=d_k, d_v=d_v,
                                block_q=128, block_kv=128)
    out = jax.block_until_ready(out)

    ref = reference_block(x, params, n_heads=n_heads, d_k=d_k)
    assert out.shape == (seq_len, d_model)
    max_err = float(jnp.max(jnp.abs(out - ref)))
    assert jnp.allclose(out, ref, atol=5e-2, rtol=5e-2), \
        f"mismatch vs reference (max abs err {max_err})"

    print("KERNEL_OK")
</pallas_src>

<mosaic_0001>
module attributes {stable_mosaic.version = 11 : i64} {
  func.func @qkv_proj_kernel(%arg0: i32, %arg1: memref<128x32xf32, #tpu.memory_space<vmem>>, %arg2: memref<32x32xbf16, #tpu.memory_space<vmem>>, %arg3: memref<32x32xbf16, #tpu.memory_space<vmem>>, %arg4: memref<32x32xbf16, #tpu.memory_space<vmem>>, %arg5: memref<128x32xbf16, #tpu.memory_space<vmem>>, %arg6: memref<128x32xbf16, #tpu.memory_space<vmem>>, %arg7: memref<128x32xbf16, #tpu.memory_space<vmem>>) attributes {dimension_semantics = [#tpu.dimension_semantics<parallel>], iteration_bounds = array<i64: 2>, scalar_prefetch = 0 : i64, scratch_operands = 0 : i64, tpu.core_type = #tpu.core_type<tc>, window_params = [{transform_indices = @transform_0, window_bounds = array<i64: 128, 32>}, {pipeline_mode = #tpu.pipeline_mode<synchronous>, transform_indices = @transform_1, window_bounds = array<i64: 32, 32>}, {pipeline_mode = #tpu.pipeline_mode<synchronous>, transform_indices = @transform_2, window_bounds = array<i64: 32, 32>}, {pipeline_mode = #tpu.pipeline_mode<synchronous>, transform_indices = @transform_3, window_bounds = array<i64: 32, 32>}, {transform_indices = @transform_4, window_bounds = array<i64: 128, 32>}, {transform_indices = @transform_5, window_bounds = array<i64: 128, 32>}, {transform_indices = @transform_6, window_bounds = array<i64: 128, 32>}]} {
    %c0 = arith.constant 0 : index
    %c0_0 = arith.constant 0 : index
    %0 = vector.load %arg1[%c0, %c0_0] : memref<128x32xf32, #tpu.memory_space<vmem>>, vector<128x32xf32>
    %1 = arith.truncf %0 : vector<128x32xf32> to vector<128x32xbf16>
    %c0_1 = arith.constant 0 : index
    %c0_2 = arith.constant 0 : index
    %2 = vector.load %arg2[%c0_1, %c0_2] : memref<32x32xbf16, #tpu.memory_space<vmem>>, vector<32x32xbf16>
    %cst = arith.constant dense<0.000000e+00> : vector<128x32xf32>
    %3 = tpu.matmul %1, %2, %cst {dimension_numbers = #tpu.dot_dimension_numbers<[1], [0], [0], [1], [0, 0, 1, 1], [], []>} : vector<128x32xbf16>, vector<32x32xbf16>, vector<128x32xf32> -> vector<128x32xf32>
    %4 = arith.truncf %3 : vector<128x32xf32> to vector<128x32xbf16>
    %c0_3 = arith.constant 0 : index
    %c0_4 = arith.constant 0 : index
    %5 = vector.load %arg5[%c0_3, %c0_4] : memref<128x32xbf16, #tpu.memory_space<vmem>>, vector<128x32xbf16>
    tpu.vector_store %arg5[%c0_3, %c0_4], %4 {strides = array<i32>} : memref<128x32xbf16, #tpu.memory_space<vmem>>, vector<128x32xbf16>,
    %c0_5 = arith.constant 0 : index
    %c0_6 = arith.constant 0 : index
    %6 = vector.load %arg3[%c0_5, %c0_6] : memref<32x32xbf16, #tpu.memory_space<vmem>>, vector<32x32xbf16>
    %cst_7 = arith.constant dense<0.000000e+00> : vector<128x32xf32>
    %7 = tpu.matmul %1, %6, %cst_7 {dimension_numbers = #tpu.dot_dimension_numbers<[1], [0], [0], [1], [0, 0, 1, 1], [], []>} : vector<128x32xbf16>, vector<32x32xbf16>, vector<128x32xf32> -> vector<128x32xf32>
    %8 = arith.truncf %7 : vector<128x32xf32> to vector<128x32xbf16>
    %c0_8 = arith.constant 0 : index
    %c0_9 = arith.constant 0 : index
    %9 = vector.load %arg6[%c0_8, %c0_9] : memref<128x32xbf16, #tpu.memory_space<vmem>>, vector<128x32xbf16>
    tpu.vector_store %arg6[%c0_8, %c0_9], %8 {strides = array<i32>} : memref<128x32xbf16, #tpu.memory_space<vmem>>, vector<128x32xbf16>,
    %c0_10 = arith.constant 0 : index
    %c0_11 = arith.constant 0 : index
    %10 = vector.load %arg4[%c0_10, %c0_11] : memref<32x32xbf16, #tpu.memory_space<vmem>>, vector<32x32xbf16>
    %cst_12 = arith.constant dense<0.000000e+00> : vector<128x32xf32>
    %11 = tpu.matmul %1, %10, %cst_12 {dimension_numbers = #tpu.dot_dimension_numbers<[1], [0], [0], [1], [0, 0, 1, 1], [], []>} : vector<128x32xbf16>, vector<32x32xbf16>, vector<128x32xf32> -> vector<128x32xf32>
    %12 = arith.truncf %11 : vector<128x32xf32> to vector<128x32xbf16>
    %c0_13 = arith.constant 0 : index
    %c0_14 = arith.constant 0 : index
    %13 = vector.load %arg7[%c0_13, %c0_14] : memref<128x32xbf16, #tpu.memory_space<vmem>>, vector<128x32xbf16>
    tpu.vector_store %arg7[%c0_13, %c0_14], %12 {strides = array<i32>} : memref<128x32xbf16, #tpu.memory_space<vmem>>, vector<128x32xbf16>,
    return
  }
  func.func @transform_0(%arg0: i32) -> (i32, i32) {
    %c0_i32 = arith.constant 0 : i32
    %c0_i32_0 = arith.constant 0 : i32
    return %arg0, %c0_i32 : i32, i32
  }
  func.func @transform_1(%arg0: i32) -> (i32, i32) {
    %c0_i32 = arith.constant 0 : i32
    %c0_i32_0 = arith.constant 0 : i32
    %c0_i32_1 = arith.constant 0 : i32
    return %c0_i32, %c0_i32_0 : i32, i32
  }
  func.func @transform_2(%arg0: i32) -> (i32, i32) {
    %c0_i32 = arith.constant 0 : i32
    %c0_i32_0 = arith.constant 0 : i32
    %c0_i32_1 = arith.constant 0 : i32
    return %c0_i32, %c0_i32_0 : i32, i32
  }
  func.func @transform_3(%arg0: i32) -> (i32, i32) {
    %c0_i32 = arith.constant 0 : i32
    %c0_i32_0 = arith.constant 0 : i32
    %c0_i32_1 = arith.constant 0 : i32
    return %c0_i32, %c0_i32_0 : i32, i32
  }
  func.func @transform_4(%arg0: i32) -> (i32, i32) {
    %c0_i32 = arith.constant 0 : i32
    %c0_i32_0 = arith.constant 0 : i32
    return %arg0, %c0_i32 : i32, i32
  }
  func.func @transform_5(%arg0: i32) -> (i32, i32) {
    %c0_i32 = arith.constant 0 : i32
    %c0_i32_0 = arith.constant 0 : i32
    return %arg0, %c0_i32 : i32, i32
  }
  func.func @transform_6(%arg0: i32) -> (i32, i32) {
    %c0_i32 = arith.constant 0 : i32
    %c0_i32_0 = arith.constant 0 : i32
    return %arg0, %c0_i32 : i32, i32
  }
}

</mosaic_0001>

<llo_original>
// kernel: tpu_custom_call.1
$region0: #{tpu_custom_call.1}
  #allocation0 [shape = 'u32[]', space=smem, size = 0x4, offset = 0x4, fixed_abs, tag = 'smem constant byte address 0x4 - core index']
  #allocation1 [shape = 'u32[72,128]{1,0:T(1,128)}', space=vmem, size = 0x9000, scoped, tag = 'internal scratch']
  %s0 = inlined_call_operand.vmem [shape: f32[256,32], index: 0, kind: input, shape index: {}]
  %s1 = inlined_call_operand.vmem [shape: bf16[32,32], index: 1, kind: input, shape index: {}]
  %s2 = inlined_call_operand.vmem [shape: bf16[32,32], index: 2, kind: input, shape index: {}]
  %s3 = inlined_call_operand.vmem [shape: bf16[32,32], index: 3, kind: input, shape index: {}]
  %s4 = inlined_call_operand.vmem [shape: bf16[256,32], index: 4, kind: output, shape index: {0}]
  %s5 = inlined_call_operand.vmem [shape: bf16[256,32], index: 5, kind: output, shape index: {1}]
  %s6 = inlined_call_operand.vmem [shape: bf16[256,32], index: 6, kind: output, shape index: {2}]
  %7 = xla_tuple %s4, %s5, %s6
  %s8 = sld [smem:[#allocation0]]
  $region65: #{tpu_custom_call.1} parent=0
    _
  %s10 = ssub.s32 1, %s8
  %s11 = scalar_select 0, %s10, %s8
  loop: start=0, step=1, limit=4
  $region2: #{tpu_custom_call.1} parent=0 // loop_pre_header
    _
  $region3: #{tpu_custom_call.1} parent=0 // loop_header
    %s13 = sphi 0, %s17
    %p14 = scmp.ge.s32.totalorder %s13, 4
    %s23 = sphi 0, %s25
    %s26 = sphi 0, %s23
    %s27 = sphi 0, %s26
    %s43 = sphi 0, %s27
    %s47 = sphi 0, %s47
    %s49 = sphi 0, %s47
    %s50 = sphi 0, %s49
    %s64 = sphi 0, %s50
    %s68 = sphi 0, %s68
    %s70 = sphi 0, %s68
    %s71 = sphi 0, %s70
    %s85 = sphi 0, %s71
    %s89 = sphi 0, %s89
    %s91 = sphi 0, %s89
    %s92 = sphi 0, %s91
    %s106 = sphi 0, %s92
    %s112 = sphi 0, %s114
    %s115 = sphi 0, %s112
    %s116 = sphi 0, %s115
    %s132 = sphi 0, %s116
    %s138 = sphi 0, %s140
    %s141 = sphi 0, %s138
    %s142 = sphi 0, %s141
    %s158 = sphi 0, %s142
    %s164 = sphi 0, %s166
    %s167 = sphi 0, %s164
    %s168 = sphi 0, %s167
    %s184 = sphi 0, %s168
  $region4: #{tpu_custom_call.1} parent=0 // loop_header_branch
    %16 = sbr.rel (%p14) target = $region8
  $region5: #{tpu_custom_call.1} parent=0 // loop_body
    %s18 = ssub.s32 %s13, 1
    %s19 = ssub.s32 %s13, 2
    %s20 = sadd.s32 %s13, 1
    %s21 = ssub.s32 %s13, %s20
    %p22 = scmp.eq.s32.totalorder %s21, 0
    %s24 = sadd.s32 %s23, 1
    %s25 = scalar_select %p22, %s23, %s24
    %p28 = pneg %p22
    %p29 = scmp.eq.s32.totalorder %s13, 1
    %p30 = por %p28, %p29
    %p31 = scmp.ne.s32.totalorder %s23, %s26
    %p32 = scmp.eq.s32.totalorder %s13, 0
    %p33 = por %p31, %p32
    %p34 = scmp.ne.s32.totalorder %s23, %s26
    %p35 = scmp.eq.s32.totalorder %s18, 1
    %p36 = por %p34, %p35
    %p37 = scmp.ne.s32.totalorder %s26, %s27
    %p38 = scmp.eq.s32.totalorder %s18, 0
    %p39 = por %p37, %p38
    %p40 = scmp.ne.s32.totalorder %s26, %s27
    %p41 = scmp.eq.s32.totalorder %s19, 1
    %p42 = por %p40, %p41
    %p44 = scmp.ne.s32.totalorder %s27, %s43
    %p45 = scmp.eq.s32.totalorder %s19, 0
    %p46 = por %p44, %p45
    %s48 = sadd.s32 %s47, 1
    %p51 = scmp.eq.s32.totalorder %s13, 1
    %p52 = scmp.ne.s32.totalorder %s47, %s49
    %p53 = scmp.eq.s32.totalorder %s13, 0
    %p54 = por %p52, %p53
    %p55 = scmp.ne.s32.totalorder %s47, %s49
    %p56 = scmp.eq.s32.totalorder %s18, 1
    %p57 = por %p55, %p56
    %p58 = scmp.ne.s32.totalorder %s49, %s50
    %p59 = scmp.eq.s32.totalorder %s18, 0
    %p60 = por %p58, %p59
    %p61 = scmp.ne.s32.totalorder %s49, %s50
    %p62 = scmp.eq.s32.totalorder %s19, 1
    %p63 = por %p61, %p62
    %p65 = scmp.ne.s32.totalorder %s50, %s64
    %p66 = scmp.eq.s32.totalorder %s19, 0
    %p67 = por %p65, %p66
    %s69 = sadd.s32 %s68, 1
    %p72 = scmp.eq.s32.totalorder %s13, 1
    %p73 = scmp.ne.s32.totalorder %s68, %s70
    %p74 = scmp.eq.s32.totalorder %s13, 0
    %p75 = por %p73, %p74
    %p76 = scmp.ne.s32.totalorder %s68, %s70
    %p77 = scmp.eq.s32.totalorder %s18, 1
    %p78 = por %p76, %p77
    %p79 = scmp.ne.s32.totalorder %s70, %s71
    %p80 = scmp.eq.s32.totalorder %s18, 0
    %p81 = por %p79, %p80
    %p82 = scmp.ne.s32.totalorder %s70, %s71
    %p83 = scmp.eq.s32.totalorder %s19, 1
    %p84 = por %p82, %p83
    %p86 = scmp.ne.s32.totalorder %s71, %s85
    %p87 = scmp.eq.s32.totalorder %s19, 0
    %p88 = por %p86, %p87
    %s90 = sadd.s32 %s89, 1
    %p93 = scmp.eq.s32.totalorder %s13, 1
    %p94 = scmp.ne.s32.totalorder %s89, %s91
    %p95 = scmp.eq.s32.totalorder %s13, 0
    %p96 = por %p94, %p95
    %p97 = scmp.ne.s32.totalorder %s89, %s91
    %p98 = scmp.eq.s32.totalorder %s18, 1
    %p99 = por %p97, %p98
    %p100 = scmp.ne.s32.totalorder %s91, %s92
    %p101 = scmp.eq.s32.totalorder %s18, 0
    %p102 = por %p100, %p101
    %p103 = scmp.ne.s32.totalorder %s91, %s92
    %p104 = scmp.eq.s32.totalorder %s19, 1
    %p105 = por %p103, %p104
    %p107 = scmp.ne.s32.totalorder %s92, %s106
    %p108 = scmp.eq.s32.totalorder %s19, 0
    %p109 = por %p107, %p108
    %s110 = ssub.s32 %s13, %s20
    %p111 = scmp.eq.s32.totalorder %s110, 0
    %s113 = sadd.s32 %s112, 1
    %s114 = scalar_select %p111, %s112, %s113
    %p117 = pneg %p111
    %p118 = scmp.eq.s32.totalorder %s13, 1
    %p119 = por %p117, %p118
    %p120 = scmp.ne.s32.totalorder %s112, %s115
    %p121 = scmp.eq.s32.totalorder %s13, 0
    %p122 = por %p120, %p121
    %p123 = scmp.ne.s32.totalorder %s112, %s115
    %p124 = scmp.eq.s32.totalorder %s18, 1
    %p125 = por %p123, %p124
    %p126 = scmp.ne.s32.totalorder %s115, %s116
    %p127 = scmp.eq.s32.totalorder %s18, 0
    %p128 = por %p126, %p127
    %p129 = scmp.ne.s32.totalorder %s115, %s116
    %p130 = scmp.eq.s32.totalorder %s19, 1
    %p131 = por %p129, %p130
    %p133 = scmp.ne.s32.totalorder %s116, %s132
    %p134 = scmp.eq.s32.totalorder %s19, 0
    %p135 = por %p133, %p134
    %s136 = ssub.s32 %s13, %s20
    %p137 = scmp.eq.s32.totalorder %s136, 0
    %s139 = sadd.s32 %s138, 1
    %s140 = scalar_select %p137, %s138, %s139
    %p143 = pneg %p137
    %p144 = scmp.eq.s32.totalorder %s13, 1
    %p145 = por %p143, %p144
    %p146 = scmp.ne.s32.totalorder %s138, %s141
    %p147 = scmp.eq.s32.totalorder %s13, 0
    %p148 = por %p146, %p147
    %p149 = scmp.ne.s32.totalorder %s138, %s141
    %p150 = scmp.eq.s32.totalorder %s18, 1
    %p151 = por %p149, %p150
    %p152 = scmp.ne.s32.totalorder %s141, %s142
    %p153 = scmp.eq.s32.totalorder %s18, 0
    %p154 = por %p152, %p153
    %p155 = scmp.ne.s32.totalorder %s141, %s142
    %p156 = scmp.eq.s32.totalorder %s19, 1
    %p157 = por %p155, %p156
    %p159 = scmp.ne.s32.totalorder %s142, %s158
    %p160 = scmp.eq.s32.totalorder %s19, 0
    %p161 = por %p159, %p160
    %s162 = ssub.s32 %s13, %s20
    %p163 = scmp.eq.s32.totalorder %s162, 0
    %s165 = sadd.s32 %s164, 1
    %s166 = scalar_select %p163, %s164, %s165
    %p169 = pneg %p163
    %p170 = scmp.eq.s32.totalorder %s13, 1
    %p171 = por %p169, %p170
    %p172 = scmp.ne.s32.totalorder %s164, %s167
    %p173 = scmp.eq.s32.totalorder %s13, 0
    %p174 = por %p172, %p173
    %p175 = scmp.ne.s32.totalorder %s164, %s167
    %p176 = scmp.eq.s32.totalorder %s18, 1
    %p177 = por %p175, %p176
    %p178 = scmp.ne.s32.totalorder %s167, %s168
    %p179 = scmp.eq.s32.totalorder %s18, 0
    %p180 = por %p178, %p179
    %p181 = scmp.ne.s32.totalorder %s167, %s168
    %p182 = scmp.eq.s32.totalorder %s19, 1
    %p183 = por %p181, %p182
    %p185 = scmp.ne.s32.totalorder %s168, %s184
    %p186 = scmp.eq.s32.totalorder %s19, 0
    %p187 = por %p185, %p186
    %p188 = scmp.le.s32.totalorder 1, %s13
    %p189 = scmp.lt.s32.totalorder %s13, 3
    %p190 = pnand %p188, %p189
    %p191 = pneg %p190
    // Predicated region
    $region9: #{tpu_custom_call.1} parent=5 // pred_check
      _
    $region10: #{tpu_custom_call.1} parent=5 // pred_check_branch
      %193 = sbr.rel (%p190) target = $region12
    $region11: #{tpu_custom_call.1} parent=5 // pred_region
      %s194 = ssub.s32 %s13, 1
      // Predicated region
      $region13: #{tpu_custom_call.1} parent=11 // pred_check
        %p195 = pneg %p60
      $region14: #{tpu_custom_call.1} parent=11 // pred_check_branch
        %197 = sbr.rel (%p195) target = $region16
      $region15: #{tpu_custom_call.1} parent=11 // pred_region
        _
      $region16: #{tpu_custom_call.1} parent=11 // pred_fallthru
        _
      // Predicated region
      $region17: #{tpu_custom_call.1} parent=11 // pred_check
        %p198 = pneg %p81
      $region18: #{tpu_custom_call.1} parent=11 // pred_check_branch
        %200 = sbr.rel (%p198) target = $region20
      $region19: #{tpu_custom_call.1} parent=11 // pred_region
        _
      $region20: #{tpu_custom_call.1} parent=11 // pred_fallthru
        _
      // Predicated region
      $region21: #{tpu_custom_call.1} parent=11 // pred_check
        %p201 = pneg %p102
      $region22: #{tpu_custom_call.1} parent=11 // pred_check_branch
        %203 = sbr.rel (%p201) target = $region24
      $region23: #{tpu_custom_call.1} parent=11 // pred_region
        _
      $region24: #{tpu_custom_call.1} parent=11 // pred_fallthru
        _
    $region12: #{tpu_custom_call.1} parent=5 // pred_fallthru
      _
    %p204 = scmp.lt.s32.totalorder %s13, 2
    // Predicated region
    $region25: #{tpu_custom_call.1} parent=5 // pred_check
      %p205 = pneg %p204
    $region26: #{tpu_custom_call.1} parent=5 // pred_check_branch
      %207 = sbr.rel (%p205) target = $region28
    $region27: #{tpu_custom_call.1} parent=5 // pred_region
      // Predicated region
      $region29: #{tpu_custom_call.1} parent=27 // pred_check
        %p208 = pneg %p33
      $region30: #{tpu_custom_call.1} parent=27 // pred_check_branch
        %210 = sbr.rel (%p208) target = $region32
      $region31: #{tpu_custom_call.1} parent=27 // pred_region
        %s211 = smul.u32 16, %s13
        %p212 = scmp.lt.s32.totalorder %s211, 31
        %s213 = scalar_select %p212, %s211, 31
        %s214 = smul.addr %s213, 8
        %s215 = scalar_lea.vmem %s0, %s214
        %s216 = smul.u32 16, %s13
      $region32: #{tpu_custom_call.1} parent=27 // pred_fallthru
        _
    $region28: #{tpu_custom_call.1} parent=5 // pred_fallthru
      _
    %p217 = scmp.le.s32.totalorder 1, %s13
    %p218 = scmp.lt.s32.totalorder %s13, 3
    %p219 = pnand %p217, %p218
    %p220 = pneg %p219
    // Predicated region
    $region33: #{tpu_custom_call.1} parent=5 // pred_check
      _
    $region34: #{tpu_custom_call.1} parent=5 // pred_check_branch
      %222 = sbr.rel (%p219) target = $region36
    $region35: #{tpu_custom_call.1} parent=5 // pred_region
      %s223 = ssub.s32 %s13, 1
      %s224 = smul.u32 16, %s18
      %p225 = scmp.lt.s32.totalorder %s224, 31
      %s226 = scalar_select %p225, %s224, 31
      %s227 = smul.addr %s226, 8
      %s228 = scalar_lea.vmem %s0, %s227
      %p229 = pneg %p39
      %p230 = pneg %p36
      %p231 = pneg %p60
      %p232 = pneg %p57
      %p233 = pneg %p81
      %p234 = pneg %p78
      %p235 = pneg %p102
      %p236 = pneg %p99
      %p237 = pneg %p128
      %p238 = pneg %p125
      %s239 = smul.u32 16, %s18
      %p240 = scmp.lt.s32.totalorder %s239, 31
      %s241 = scalar_select %p240, %s239, 31
      %s242 = smul.addr %s241, 4
      %s243 = scalar_lea.vmem %s4, %s242
      %p244 = pneg %p154
      %p245 = pneg %p151
      %s246 = smul.u32 16, %s18
      %p247 = scmp.lt.s32.totalorder %s246, 31
      %s248 = scalar_select %p247, %s246, 31
      %s249 = smul.addr %s248, 4
      %s250 = scalar_lea.vmem %s5, %s249
      %p251 = pneg %p180
      %p252 = pneg %p177
      %s253 = smul.u32 16, %s18
      %p254 = scmp.lt.s32.totalorder %s253, 31
      %s255 = scalar_select %p254, %s253, 31
      %s256 = smul.addr %s255, 4
      %s257 = scalar_lea.vmem %s6, %s256
      %s258 = smul.u32 16, %s18
      %p259 = scmp.lt.s32.totalorder %s258, 31
      %s260 = scalar_select %p259, %s258, 31
      %s261 = smul.addr %s260, 8
      %s262 = scalar_lea.vmem %s0, %s261
      %s263 = smul.u32 16, %s18
      %s264 = smul.u32 16, %s18
      %p265 = scmp.lt.s32.totalorder %s264, 31
      %s266 = scalar_select %p265, %s264, 31
      %s267 = smul.addr %s266, 4
      %s268 = scalar_lea.vmem %s4, %s267
      %s269 = smul.u32 16, %s18
      %s270 = smul.u32 16, %s18
      %p271 = scmp.lt.s32.totalorder %s270, 31
      %s272 = scalar_select %p271, %s270, 31
      %s273 = smul.addr %s272, 4
      %s274 = scalar_lea.vmem %s5, %s273
      %s275 = smul.u32 16, %s18
      %s276 = smul.u32 16, %s18
      %p277 = scmp.lt.s32.totalorder %s276, 31
      %s278 = scalar_select %p277, %s276, 31
      %s279 = smul.addr %s278, 4
      %s280 = scalar_lea.vmem %s6, %s279
      %s281 = smul.u32 16, %s18
      %v283 = vld [vmem:[%s262] sm:$0xff]
      %v284 = vld [vmem:[%s262 + $0x8] sm:$0xff]
      %v285 = vld [vmem:[%s262 + $0x10] sm:$0xff]
      %v286 = vld [vmem:[%s262 + $0x18] sm:$0xff]
      %v287 = vld [vmem:[%s262 + $0x20] sm:$0xff]
      %v288 = vld [vmem:[%s262 + $0x28] sm:$0xff]
      %v289 = vld [vmem:[%s262 + $0x30] sm:$0xff]
      %v290 = vld [vmem:[%s262 + $0x38] sm:$0xff]
      %v291 = vld [vmem:[%s262 + $0x40] sm:$0xff]
      %v292 = vld [vmem:[%s262 + $0x48] sm:$0xff]
      %v293 = vld [vmem:[%s262 + $0x50] sm:$0xff]
      %v294 = vld [vmem:[%s262 + $0x58] sm:$0xff]
      %v295 = vld [vmem:[%s262 + $0x60] sm:$0xff]
      %v296 = vld [vmem:[%s262 + $0x68] sm:$0xff]
      %v297 = vld [vmem:[%s262 + $0x70] sm:$0xff]
      %v298 = vld [vmem:[%s262 + $0x78] sm:$0xff]
      %v299 = vpack.c.bf16 %v284, %v283
      %v300 = vpack.c.bf16 %v286, %v285
      %v301 = vpack.c.bf16 %v288, %v287
      %v302 = vpack.c.bf16 %v290, %v289
      %v303 = vpack.c.bf16 %v292, %v291
      %v304 = vpack.c.bf16 %v294, %v293
      %v305 = vpack.c.bf16 %v296, %v295
      %v306 = vpack.c.bf16 %v298, %v297
      %v307 = vld [vmem:[%s1] sm:$0xf]
      %v308 = vld [vmem:[%s1 + $0x4] sm:$0xf]
      %v309 = vld [vmem:[%s1 + $0x8] sm:$0xf]
      %v310 = vld [vmem:[%s1 + $0xc] sm:$0xf]
      %v315 = vunpack.c.l.b16 %v307
      %v316 = vunpack.c.l.b16 %v308
      %v317 = vunpack.c.l.b16 %v309
      %v318 = vunpack.c.l.b16 %v310
      %v319 = vpack.c.b16 %v316, %v315
      %v320 = vpack.c.b16 %v318, %v317
      %vm323 = vcmask 261120
      %v325 = vsel %vm323, %v299, 0
      %v328 = vsel %vm323, %v300, 0
      %v331 = vsel %vm323, %v301, 0
      %v334 = vsel %vm323, %v302, 0
      %v337 = vsel %vm323, %v303, 0
      %v340 = vsel %vm323, %v304, 0
      %v343 = vsel %vm323, %v305, 0
      %v346 = vsel %vm323, %v306, 0
      %348 = vmatpush.bf16.msra.mxu0 0
      %349 = vmatpush.bf16.msra.mxu0 0
      %350 = vmatpush.bf16.msra.mxu0 0
      %351 = vmatpush.bf16.msra.mxu0 0
      %352 = vmatpush.bf16.msra.mxu0 0
      %353 = vmatpush.bf16.msra.mxu0 0
      %354 = vmatpush.bf16.msra.mxu0 %v320
      %355 = vmatpush.bf16.msra.mxu0 %v319
      %356 = vmatmul.bf16.gmra.mxu0 %v325
      %v357 = vpop.f32.mrf.mxu0
      %v358 = vadd.f32 0.0, %v357
      %v359 = vpop.f32.mrf.mxu0
      %v360 = vadd.f32 0.0, %v359
      %361 = vmatmul.bf16.gmra.mxu0 %v328
      %v362 = vpop.f32.mrf.mxu0
      %v363 = vadd.f32 0.0, %v362
      %v364 = vpop.f32.mrf.mxu0
      %v365 = vadd.f32 0.0, %v364
      %366 = vmatmul.bf16.gmra.mxu0 %v331
      %v367 = vpop.f32.mrf.mxu0
      %v368 = vadd.f32 0.0, %v367
      %v369 = vpop.f32.mrf.mxu0
      %v370 = vadd.f32 0.0, %v369
      %371 = vmatmul.bf16.gmra.mxu0 %v334
      %v372 = vpop.f32.mrf.mxu0
      %v373 = vadd.f32 0.0, %v372
      %v374 = vpop.f32.mrf.mxu0
      %v375 = vadd.f32 0.0, %v374
      %376 = vmatmul.bf16.gmra.mxu0 %v337
      %v377 = vpop.f32.mrf.mxu0
      %v378 = vadd.f32 0.0, %v377
      %v379 = vpop.f32.mrf.mxu0
      %v380 = vadd.f32 0.0, %v379
      %381 = vmatmul.bf16.gmra.mxu0 %v340
      %v382 = vpop.f32.mrf.mxu0
      %v383 = vadd.f32 0.0, %v382
      %v384 = vpop.f32.mrf.mxu0
      %v385 = vadd.f32 0.0, %v384
      %386 = vmatmul.bf16.gmra.mxu0 %v343
      %v387 = vpop.f32.mrf.mxu0
      %v388 = vadd.f32 0.0, %v387
      %v389 = vpop.f32.mrf.mxu0
      %v390 = vadd.f32 0.0, %v389
      %391 = vmatmul.bf16.gmra.mxu0 %v346
      %v392 = vpop.f32.mrf.mxu0
      %v393 = vadd.f32 0.0, %v392
      %v394 = vpop.f32.mrf.mxu0
      %v395 = vadd.f32 0.0, %v394
      %396 = vdwg.mxu0
      %v397 = vpack.c.bf16 %v358, %v358
      %v398 = vpack.c.bf16 %v360, %v360
      %v399 = vpack.c.bf16 %v363, %v363
      %v400 = vpack.c.bf16 %v365, %v365
      %v401 = vpack.c.bf16 %v368, %v368
      %v402 = vpack.c.bf16 %v370, %v370
      %v403 = vpack.c.bf16 %v373, %v373
      %v404 = vpack.c.bf16 %v375, %v375
      %v405 = vpack.c.bf16 %v378, %v378
      %v406 = vpack.c.bf16 %v380, %v380
      %v407 = vpack.c.bf16 %v383, %v383
      %v408 = vpack.c.bf16 %v385, %v385
      %v409 = vpack.c.bf16 %v388, %v388
      %v410 = vpack.c.bf16 %v390, %v390
      %v411 = vpack.c.bf16 %v393, %v393
      %v412 = vpack.c.bf16 %v395, %v395
      %vm413 = vcmask 257024
      %414 = vst.msk [vmem:[%s268] sm:$0xf] %vm413, %v397
      %415 = vst.msk [vmem:[%s268 + $0x4] sm:$0xf] %vm413, %v398
      %416 = vst.msk [vmem:[%s268 + $0x8] sm:$0xf] %vm413, %v399
      %417 = vst.msk [vmem:[%s268 + $0xc] sm:$0xf] %vm413, %v400
      %418 = vst.msk [vmem:[%s268 + $0x10] sm:$0xf] %vm413, %v401
      %419 = vst.msk [vmem:[%s268 + $0x14] sm:$0xf] %vm413, %v402
      %420 = vst.msk [vmem:[%s268 + $0x18] sm:$0xf] %vm413, %v403
      %421 = vst.msk [vmem:[%s268 + $0x1c] sm:$0xf] %vm413, %v404
      %422 = vst.msk [vmem:[%s268 + $0x20] sm:$0xf] %vm413, %v405
      %423 = vst.msk [vmem:[%s268 + $0x24] sm:$0xf] %vm413, %v406
      %424 = vst.msk [vmem:[%s268 + $0x28] sm:$0xf] %vm413, %v407
      %425 = vst.msk [vmem:[%s268 + $0x2c] sm:$0xf] %vm413, %v408
      %426 = vst.msk [vmem:[%s268 + $0x30] sm:$0xf] %vm413, %v409
      %427 = vst.msk [vmem:[%s268 + $0x34] sm:$0xf] %vm413, %v410
      %428 = vst.msk [vmem:[%s268 + $0x38] sm:$0xf] %vm413, %v411
      %429 = vst.msk [vmem:[%s268 + $0x3c] sm:$0xf] %vm413, %v412
      %v430 = vld [vmem:[%s2] sm:$0xf]
      %v431 = vld [vmem:[%s2 + $0x4] sm:$0xf]
      %v432 = vld [vmem:[%s2 + $0x8] sm:$0xf]
      %v433 = vld [vmem:[%s2 + $0xc] sm:$0xf]
      %v438 = vunpack.c.l.b16 %v430
      %v439 = vunpack.c.l.b16 %v431
      %v440 = vunpack.c.l.b16 %v432
      %v441 = vunpack.c.l.b16 %v433
      %v442 = vpack.c.b16 %v439, %v438
      %v443 = vpack.c.b16 %v441, %v440
      %446 = vmatpush.bf16.msra.mxu0 0
      %447 = vmatpush.bf16.msra.mxu0 0
      %448 = vmatpush.bf16.msra.mxu0 0
      %449 = vmatpush.bf16.msra.mxu0 0
      %450 = vmatpush.bf16.msra.mxu0 0
      %451 = vmatpush.bf16.msra.mxu0 0
      %452 = vmatpush.bf16.msra.mxu0 %v443
      %453 = vmatpush.bf16.msra.mxu0 %v442
      %454 = vmatmul.bf16.gmra.mxu0 %v325
      %v455 = vpop.f32.mrf.mxu0
      %v456 = vadd.f32 0.0, %v455
      %v457 = vpop.f32.mrf.mxu0
      %v458 = vadd.f32 0.0, %v457
      %459 = vmatmul.bf16.gmra.mxu0 %v328
      %v460 = vpop.f32.mrf.mxu0
      %v461 = vadd.f32 0.0, %v460
      %v462 = vpop.f32.mrf.mxu0
      %v463 = vadd.f32 0.0, %v462
      %464 = vmatmul.bf16.gmra.mxu0 %v331
      %v465 = vpop.f32.mrf.mxu0
      %v466 = vadd.f32 0.0, %v465
      %v467 = vpop.f32.mrf.mxu0
      %v468 = vadd.f32 0.0, %v467
      %469 = vmatmul.bf16.gmra.mxu0 %v334
      %v470 = vpop.f32.mrf.mxu0
      %v471 = vadd.f32 0.0, %v470
      %v472 = vpop.f32.mrf.mxu0
      %v473 = vadd.f32 0.0, %v472
      %474 = vmatmul.bf16.gmra.mxu0 %v337
      %v475 = vpop.f32.mrf.mxu0
      %v476 = vadd.f32 0.0, %v475
      %v477 = vpop.f32.mrf.mxu0
      %v478 = vadd.f32 0.0, %v477
      %479 = vmatmul.bf16.gmra.mxu0 %v340
      %v480 = vpop.f32.mrf.mxu0
      %v481 = vadd.f32 0.0, %v480
      %v482 = vpop.f32.mrf.mxu0
      %v483 = vadd.f32 0.0, %v482
      %484 = vmatmul.bf16.gmra.mxu0 %v343
      %v485 = vpop.f32.mrf.mxu0
      %v486 = vadd.f32 0.0, %v485
      %v487 = vpop.f32.mrf.mxu0
      %v488 = vadd.f32 0.0, %v487
      %489 = vmatmul.bf16.gmra.mxu0 %v346
      %v490 = vpop.f32.mrf.mxu0
      %v491 = vadd.f32 0.0, %v490
      %v492 = vpop.f32.mrf.mxu0
      %v493 = vadd.f32 0.0, %v492
      %494 = vdwg.mxu0
      %v495 = vpack.c.bf16 %v456, %v456
      %v496 = vpack.c.bf16 %v458, %v458
      %v497 = vpack.c.bf16 %v461, %v461
      %v498 = vpack.c.bf16 %v463, %v463
      %v499 = vpack.c.bf16 %v466, %v466
      %v500 = vpack.c.bf16 %v468, %v468
      %v501 = vpack.c.bf16 %v471, %v471
      %v502 = vpack.c.bf16 %v473, %v473
      %v503 = vpack.c.bf16 %v476, %v476
      %v504 = vpack.c.bf16 %v478, %v478
      %v505 = vpack.c.bf16 %v481, %v481
      %v506 = vpack.c.bf16 %v483, %v483
      %v507 = vpack.c.bf16 %v486, %v486
      %v508 = vpack.c.bf16 %v488, %v488
      %v509 = vpack.c.bf16 %v491, %v491
      %v510 = vpack.c.bf16 %v493, %v493
      %511 = vst.msk [vmem:[%s274] sm:$0xf] %vm413, %v495
      %512 = vst.msk [vmem:[%s274 + $0x4] sm:$0xf] %vm413, %v496
      %513 = vst.msk [vmem:[%s274 + $0x8] sm:$0xf] %vm413, %v497
      %514 = vst.msk [vmem:[%s274 + $0xc] sm:$0xf] %vm413, %v498
      %515 = vst.msk [vmem:[%s274 + $0x10] sm:$0xf] %vm413, %v499
      %516 = vst.msk [vmem:[%s274 + $0x14] sm:$0xf] %vm413, %v500
      %517 = vst.msk [vmem:[%s274 + $0x18] sm:$0xf] %vm413, %v501
      %518 = vst.msk [vmem:[%s274 + $0x1c] sm:$0xf] %vm413, %v502
      %519 = vst.msk [vmem:[%s274 + $0x20] sm:$0xf] %vm413, %v503
      %520 = vst.msk [vmem:[%s274 + $0x24] sm:$0xf] %vm413, %v504
      %521 = vst.msk [vmem:[%s274 + $0x28] sm:$0xf] %vm413, %v505
      %522 = vst.msk [vmem:[%s274 + $0x2c] sm:$0xf] %vm413, %v506
      %523 = vst.msk [vmem:[%s274 + $0x30] sm:$0xf] %vm413, %v507
      %524 = vst.msk [vmem:[%s274 + $0x34] sm:$0xf] %vm413, %v508
      %525 = vst.msk [vmem:[%s274 + $0x38] sm:$0xf] %vm413, %v509
      %526 = vst.msk [vmem:[%s274 + $0x3c] sm:$0xf] %vm413, %v510
      %v527 = vld [vmem:[%s3] sm:$0xf]
      %v528 = vld [vmem:[%s3 + $0x4] sm:$0xf]
      %v529 = vld [vmem:[%s3 + $0x8] sm:$0xf]
      %v530 = vld [vmem:[%s3 + $0xc] sm:$0xf]
      %v535 = vunpack.c.l.b16 %v527
      %v536 = vunpack.c.l.b16 %v528
      %v537 = vunpack.c.l.b16 %v529
      %v538 = vunpack.c.l.b16 %v530
      %v539 = vpack.c.b16 %v536, %v535
      %v540 = vpack.c.b16 %v538, %v537
      %543 = vmatpush.bf16.msra.mxu0 0
      %544 = vmatpush.bf16.msra.mxu0 0
      %545 = vmatpush.bf16.msra.mxu0 0
      %546 = vmatpush.bf16.msra.mxu0 0
      %547 = vmatpush.bf16.msra.mxu0 0
      %548 = vmatpush.bf16.msra.mxu0 0
      %549 = vmatpush.bf16.msra.mxu0 %v540
      %550 = vmatpush.bf16.msra.mxu0 %v539
      %551 = vmatmul.bf16.gmra.mxu0 %v325
      %v552 = vpop.f32.mrf.mxu0
      %v553 = vadd.f32 0.0, %v552
      %v554 = vpop.f32.mrf.mxu0
      %v555 = vadd.f32 0.0, %v554
      %556 = vmatmul.bf16.gmra.mxu0 %v328
      %v557 = vpop.f32.mrf.mxu0
      %v558 = vadd.f32 0.0, %v557
      %v559 = vpop.f32.mrf.mxu0
      %v560 = vadd.f32 0.0, %v559
      %561 = vmatmul.bf16.gmra.mxu0 %v331
      %v562 = vpop.f32.mrf.mxu0
      %v563 = vadd.f32 0.0, %v562
      %v564 = vpop.f32.mrf.mxu0
      %v565 = vadd.f32 0.0, %v564
      %566 = vmatmul.bf16.gmra.mxu0 %v334
      %v567 = vpop.f32.mrf.mxu0
      %v568 = vadd.f32 0.0, %v567
      %v569 = vpop.f32.mrf.mxu0
      %v570 = vadd.f32 0.0, %v569
      %571 = vmatmul.bf16.gmra.mxu0 %v337
      %v572 = vpop.f32.mrf.mxu0
      %v573 = vadd.f32 0.0, %v572
      %v574 = vpop.f32.mrf.mxu0
      %v575 = vadd.f32 0.0, %v574
      %576 = vmatmul.bf16.gmra.mxu0 %v340
      %v577 = vpop.f32.mrf.mxu0
      %v578 = vadd.f32 0.0, %v577
      %v579 = vpop.f32.mrf.mxu0
      %v580 = vadd.f32 0.0, %v579
      %581 = vmatmul.bf16.gmra.mxu0 %v343
      %v582 = vpop.f32.mrf.mxu0
      %v583 = vadd.f32 0.0, %v582
      %v584 = vpop.f32.mrf.mxu0
      %v585 = vadd.f32 0.0, %v584
      %586 = vmatmul.bf16.gmra.mxu0 %v346
      %v587 = vpop.f32.mrf.mxu0
      %v588 = vadd.f32 0.0, %v587
      %v589 = vpop.f32.mrf.mxu0
      %v590 = vadd.f32 0.0, %v589
      %591 = vdwg.mxu0
      %v592 = vpack.c.bf16 %v553, %v553
      %v593 = vpack.c.bf16 %v555, %v555
      %v594 = vpack.c.bf16 %v558, %v558
      %v595 = vpack.c.bf16 %v560, %v560
      %v596 = vpack.c.bf16 %v563, %v563
      %v597 = vpack.c.bf16 %v565, %v565
      %v598 = vpack.c.bf16 %v568, %v568
      %v599 = vpack.c.bf16 %v570, %v570
      %v600 = vpack.c.bf16 %v573, %v573
      %v601 = vpack.c.bf16 %v575, %v575
      %v602 = vpack.c.bf16 %v578, %v578
      %v603 = vpack.c.bf16 %v580, %v580
      %v604 = vpack.c.bf16 %v583, %v583
      %v605 = vpack.c.bf16 %v585, %v585
      %v606 = vpack.c.bf16 %v588, %v588
      %v607 = vpack.c.bf16 %v590, %v590
      %608 = vst.msk [vmem:[%s280] sm:$0xf] %vm413, %v592
      %609 = vst.msk [vmem:[%s280 + $0x4] sm:$0xf] %vm413, %v593
      %610 = vst.msk [vmem:[%s280 + $0x8] sm:$0xf] %vm413, %v594
      %611 = vst.msk [vmem:[%s280 + $0xc] sm:$0xf] %vm413, %v595
      %612 = vst.msk [vmem:[%s280 + $0x10] sm:$0xf] %vm413, %v596
      %613 = vst.msk [vmem:[%s280 + $0x14] sm:$0xf] %vm413, %v597
      %614 = vst.msk [vmem:[%s280 + $0x18] sm:$0xf] %vm413, %v598
      %615 = vst.msk [vmem:[%s280 + $0x1c] sm:$0xf] %vm413, %v599
      %616 = vst.msk [vmem:[%s280 + $0x20] sm:$0xf] %vm413, %v600
      %617 = vst.msk [vmem:[%s280 + $0x24] sm:$0xf] %vm413, %v601
      %618 = vst.msk [vmem:[%s280 + $0x28] sm:$0xf] %vm413, %v602
      %619 = vst.msk [vmem:[%s280 + $0x2c] sm:$0xf] %vm413, %v603
      %620 = vst.msk [vmem:[%s280 + $0x30] sm:$0xf] %vm413, %v604
      %621 = vst.msk [vmem:[%s280 + $0x34] sm:$0xf] %vm413, %v605
      %622 = vst.msk [vmem:[%s280 + $0x38] sm:$0xf] %vm413, %v606
      %623 = vst.msk [vmem:[%s280 + $0x3c] sm:$0xf] %vm413, %v607
      %s624 = smul.u32 16, %s18
      %p625 = scmp.lt.s32.totalorder %s624, 31
      %s626 = scalar_select %p625, %s624, 31
      %s627 = smul.addr %s626, 4
      %s628 = scalar_lea.vmem %s4, %s627
      %s629 = smul.u32 16, %s18
      %p630 = scmp.lt.s32.totalorder %s629, 31
      %s631 = scalar_select %p630, %s629, 31
      %s632 = smul.addr %s631, 4
      %s633 = scalar_lea.vmem %s5, %s632
      %s634 = smul.u32 16, %s18
      %p635 = scmp.lt.s32.totalorder %s634, 31
      %s636 = scalar_select %p635, %s634, 31
      %s637 = smul.addr %s636, 4
      %s638 = scalar_lea.vmem %s6, %s637
      // Predicated region
      $region37: #{tpu_custom_call.1} parent=35 // pred_check
        %p639 = pneg %p125
      $region38: #{tpu_custom_call.1} parent=35 // pred_check_branch
        %641 = sbr.rel (%p639) target = $region40
      $region39: #{tpu_custom_call.1} parent=35 // pred_region
        %s642 = smul.u32 16, %s18
      $region40: #{tpu_custom_call.1} parent=35 // pred_fallthru
        _
      // Predicated region
      $region41: #{tpu_custom_call.1} parent=35 // pred_check
        %p643 = pneg %p151
      $region42: #{tpu_custom_call.1} parent=35 // pred_check_branch
        %645 = sbr.rel (%p643) target = $region44
      $region43: #{tpu_custom_call.1} parent=35 // pred_region
        %s646 = smul.u32 16, %s18
      $region44: #{tpu_custom_call.1} parent=35 // pred_fallthru
        _
      // Predicated region
      $region45: #{tpu_custom_call.1} parent=35 // pred_check
        %p647 = pneg %p177
      $region46: #{tpu_custom_call.1} parent=35 // pred_check_branch
        %649 = sbr.rel (%p647) target = $region48
      $region47: #{tpu_custom_call.1} parent=35 // pred_region
        %s650 = smul.u32 16, %s18
      $region48: #{tpu_custom_call.1} parent=35 // pred_fallthru
        _
    $region36: #{tpu_custom_call.1} parent=5 // pred_fallthru
      _
    %p651 = scmp.le.s32.totalorder 2, %s13
    // Predicated region
    $region49: #{tpu_custom_call.1} parent=5 // pred_check
      %p652 = pneg %p651
    $region50: #{tpu_custom_call.1} parent=5 // pred_check_branch
      %654 = sbr.rel (%p652) target = $region52
    $region51: #{tpu_custom_call.1} parent=5 // pred_region
      %s655 = ssub.s32 %s13, 2
      // Predicated region
      $region53: #{tpu_custom_call.1} parent=51 // pred_check
        %p656 = pneg %p131
      $region54: #{tpu_custom_call.1} parent=51 // pred_check_branch
        %658 = sbr.rel (%p656) target = $region56
      $region55: #{tpu_custom_call.1} parent=51 // pred_region
        %s659 = smul.u32 16, %s19
        %p660 = scmp.lt.s32.totalorder %s659, 31
        %s661 = scalar_select %p660, %s659, 31
        %s662 = smul.addr %s661, 4
        %s663 = scalar_lea.vmem %s4, %s662
      $region56: #{tpu_custom_call.1} parent=51 // pred_fallthru
        _
      // Predicated region
      $region57: #{tpu_custom_call.1} parent=51 // pred_check
        %p664 = pneg %p157
      $region58: #{tpu_custom_call.1} parent=51 // pred_check_branch
        %666 = sbr.rel (%p664) target = $region60
      $region59: #{tpu_custom_call.1} parent=51 // pred_region
        %s667 = smul.u32 16, %s19
        %p668 = scmp.lt.s32.totalorder %s667, 31
        %s669 = scalar_select %p668, %s667, 31
        %s670 = smul.addr %s669, 4
        %s671 = scalar_lea.vmem %s5, %s670
      $region60: #{tpu_custom_call.1} parent=51 // pred_fallthru
        _
      // Predicated region
      $region61: #{tpu_custom_call.1} parent=51 // pred_check
        %p672 = pneg %p183
      $region62: #{tpu_custom_call.1} parent=51 // pred_check_branch
        %674 = sbr.rel (%p672) target = $region64
      $region63: #{tpu_custom_call.1} parent=51 // pred_region
        %s675 = smul.u32 16, %s19
        %p676 = scmp.lt.s32.totalorder %s675, 31
        %s677 = scalar_select %p676, %s675, 31
        %s678 = smul.addr %s677, 4
        %s679 = scalar_lea.vmem %s6, %s678
      $region64: #{tpu_custom_call.1} parent=51 // pred_fallthru
        _
    $region52: #{tpu_custom_call.1} parent=5 // pred_fallthru
      _
  $region6: #{tpu_custom_call.1} parent=0 // loop_footer
    %s17 = sadd.s32 1, %s13
  $region7: #{tpu_custom_call.1} parent=0 // loop_footer_branch
    %12 = sbr.rel target = $region3
  $region8: #{tpu_custom_call.1} parent=0 // loop_exit
    _

</llo_original>
